<compile_context>
chip_gen: v6e
topology: v6e:2x2x1
jax: 0.10.0
libtpu: 0.0.40
codegen_flags: <defaults>
</compile_context>

<pallas_src>
import functools

import numpy as np
import jax
import jax.numpy as jnp
from jax import lax
from jax.experimental import pallas as pl
from jax.experimental.pallas import tpu as pltpu

_WIDTH = 512           # lane-dense last dim (multiple of 128 -> unmasked vst)
_MAX_TILE_ROWS = 4096  # 4096 x 512 x 4 B = 8 MiB / tile (16 MiB double-buffered)

# splitmix32 / lowbias32 constants as NUMPY scalars (literalizable -> they are
# inlined into the jaxpr instead of being lifted to captured constants).
_C1 = np.uint32(0x7FEB352D)
_C2 = np.uint32(0x846CA68B)
_EXP_ONE = np.uint32(0x3F800000)   # bit pattern of float32 1.0


def _uniform_kernel(seed_ref, o_ref):
    """Fill o_ref (tile_rows, _WIDTH) with uniform [0, 1) float32 samples.

    Stateless counter-based PRNG: lowbias32-style finalizer over the global
    flat element index, with the (separately hashed) seed XORed mid-round.
    Grid tiles cover disjoint index ranges, so results are independent of how
    the grid is sharded across cores.
    """
    tile_rows, width = o_ref.shape
    shift = width.bit_length() - 1
    assert width == (1 << shift), "width must be a power of two"

    # ---- scalar prologue: once per tile, on the scalar unit ----------------
    s = seed_ref[0].astype(jnp.uint32)          # hash the seed -> decorrelated
    s = s ^ (s >> 16)
    s = s * _C1
    s = s ^ (s >> 15)
    s = s * _C2
    s = s ^ (s >> 16)
    base = (pl.program_id(0) * (tile_rows * width)).astype(jnp.uint32)

    # ---- per-element counter (row*width strength-reduced to a shift) -------
    row = lax.broadcasted_iota(jnp.int32, (tile_rows, width), 0)
    col = lax.broadcasted_iota(jnp.int32, (tile_rows, width), 1)
    x = ((row << shift) + col).astype(jnp.uint32) + base

    # ---- finalizer ----------------------------------------------------------
    x = x ^ (x >> 16)
    x = x * _C1
    x = x ^ s
    x = x ^ (x >> 15)
    x = x * _C2
    x = x ^ (x >> 16)

    # uniform in [1, 2) via the exponent trick, then subtract 1 -> [0, 1)
    bits = (x >> 9) | _EXP_ONE
    o_ref[...] = lax.bitcast_convert_type(bits, jnp.float32) - jnp.float32(1.0)


def _round_up(x: int, m: int) -> int:
    return ((x + m - 1) // m) * m


@functools.lru_cache(maxsize=None)
def _build_sampler(n: int, num_u: int):
    """Compile (once per (n, num_u)) a jitted sampler: seed (1,) -> (n, num_u)."""
    total = n * num_u
    rows_needed = -(-total // _WIDTH)

    if rows_needed > 16:
        # Guarantee >= 2 grid steps so v7x's two TensorCores both get work.
        target = _round_up(-(-rows_needed // 2), 8)
    else:
        target = _round_up(rows_needed, 8)
    tile_rows = min(_MAX_TILE_ROWS, max(8, target))
    num_tiles = -(-rows_needed // tile_rows)
    rows_pad = num_tiles * tile_rows

    call = pl.pallas_call(
        _uniform_kernel,
        out_shape=jax.ShapeDtypeStruct((rows_pad, _WIDTH), jnp.float32),
        grid_spec=pltpu.PrefetchScalarGridSpec(
            num_scalar_prefetch=1,                 # seed lives in SMEM
            grid=(num_tiles,),
            in_specs=[],
            out_specs=pl.BlockSpec((tile_rows, _WIDTH),
                                   lambda i, seed_ref: (i, 0)),
        ),
        compiler_params=pltpu.CompilerParams(
            dimension_semantics=("parallel",),     # megacore split on v7x
            vmem_limit_bytes=32 * 1024 * 1024,     # safe on v5e/v6e/v7x
        ),
    )

    def run(seed_arr):
        slab = call(seed_arr)                      # (rows_pad, _WIDTH), dense
        flat = slab.reshape(-1)
        if rows_pad * _WIDTH != total:
            flat = flat[:total]                    # static slice, stays in-jit
        return flat.reshape(n, num_u)

    return jax.jit(run)


def _pallas_uniform(seed, n: int, num_u: int):
    sampler = _build_sampler(n, num_u)
    seed_arr = jnp.asarray(seed, dtype=jnp.int32).reshape((1,))
    return sampler(seed_arr)


class Distribution:
    """JAX/Pallas port of scm.distribution.Distribution.

    `u` is the iterable of exogenous-variable names (the PyTorch module only
    stores `u` plus an empty device-placement parameter).
    """

    def __init__(self, u):
        self.u = list(u)
        # nn.Parameter(T.empty(0)) equivalent: empty device-placement param.
        self.device_param = jnp.zeros((0,), dtype=jnp.float32)

    def __iter__(self):
        return iter(self.u)

    def sample(self, n=1, seed=0):
        # TODO(synk): upstream `sample` is abstract (NotImplementedError); we
        # realize the canonical i.i.d. U[0,1) sampler as the concrete forward.
        # Callers must vary `seed` across calls to get fresh draws.
        num_u = len(self.u)
        if n * num_u == 0:
            return jnp.zeros((n, num_u), dtype=jnp.float32)
        return _pallas_uniform(seed, n, num_u)

    def forward(self, n=1, seed=0):
        # PyTorch: `raise self.sample(n=n)`; concrete semantics: return n samples.
        return self.sample(n=n, seed=seed)

    def __call__(self, n=1, seed=0):
        return self.forward(n=n, seed=seed)


if __name__ == "__main__":
    key = jax.random.PRNGKey(0)
    seed = jax.random.randint(key, (), 0, 2**31 - 1, dtype=jnp.int32)

    # Small, forward-implied shapes: 4 exogenous variables, n=8 samples.
    u_names = ["U0", "U1", "U2", "U3"]
    dist = Distribution(u_names)

    n = 8
    samples = jax.block_until_ready(dist(n=n, seed=seed))
    assert samples.shape == (n, len(u_names)), samples.shape
    assert samples.dtype == jnp.float32
    assert bool(jnp.all(samples >= 0.0)) and bool(jnp.all(samples < 1.0))

    # Determinism: same seed -> same draws.
    samples2 = jax.block_until_ready(dist(n=n, seed=seed))
    assert bool(jnp.all(samples == samples2))

    # Different seed -> different draws.
    samples3 = jax.block_until_ready(dist(n=n, seed=seed + 1))
    assert not bool(jnp.all(samples == samples3))

    # Larger draw through the cached / multi-tile path + loose moment check.
    big = jax.block_until_ready(dist(n=4096, seed=seed))
    assert big.shape == (4096, len(u_names))
    assert bool(jnp.all(big >= 0.0)) and bool(jnp.all(big < 1.0))
    mean = float(jnp.mean(big))
    assert 0.4 < mean < 0.6, mean

    print("KERNEL_OK")
</pallas_src>

<mosaic_0001>
module attributes {stable_mosaic.version = 11 : i64} {
  func.func @_uniform_kernel(%arg0: i32, %arg1: memref<1xi32, #tpu.memory_space<smem>>, %arg2: memref<8x512xf32, #tpu.memory_space<vmem>>) attributes {dimension_semantics = [#tpu.dimension_semantics<parallel>], iteration_bounds = array<i64: 1>, scalar_prefetch = 1 : i64, scratch_operands = 0 : i64, tpu.core_type = #tpu.core_type<tc>, window_params = [{transform_indices = @transform_0, window_bounds = array<i64: 8, 512>}]} {
    %c0 = arith.constant 0 : index
    %0 = memref.load %arg1[%c0] : memref<1xi32, #tpu.memory_space<smem>>
    %c16_i32 = arith.constant 16 : i32
    %1 = arith.shrui %0, %c16_i32 : i32
    %2 = arith.xori %0, %1 : i32
    %c2146121005_i32 = arith.constant 2146121005 : i32
    %3 = arith.muli %2, %c2146121005_i32 : i32
    %c15_i32 = arith.constant 15 : i32
    %4 = arith.shrui %3, %c15_i32 : i32
    %5 = arith.xori %3, %4 : i32
    %c-2073254261_i32 = arith.constant -2073254261 : i32
    %6 = arith.muli %5, %c-2073254261_i32 : i32
    %c16_i32_0 = arith.constant 16 : i32
    %7 = arith.shrui %6, %c16_i32_0 : i32
    %8 = arith.xori %6, %7 : i32
    %c4096_i32 = arith.constant 4096 : i32
    %9 = arith.muli %arg0, %c4096_i32 : i32
    %10 = tpu.iota {dimensions = array<i32: 0>} : vector<8x512xi32>
    %11 = tpu.iota {dimensions = array<i32: 1>} : vector<8x512xi32>
    %c9_i32 = arith.constant 9 : i32
    %12 = vector.broadcast %c9_i32 : i32 to vector<8x512xi32>
    %13 = arith.shli %10, %12 : vector<8x512xi32>
    %14 = arith.addi %13, %11 : vector<8x512xi32>
    %15 = vector.broadcast %9 : i32 to vector<8x512xi32>
    %16 = arith.addi %14, %15 : vector<8x512xi32>
    %c16_i32_1 = arith.constant 16 : i32
    %17 = vector.broadcast %c16_i32_1 : i32 to vector<8x512xi32>
    %18 = arith.shrui %16, %17 : vector<8x512xi32>
    %19 = arith.xori %16, %18 : vector<8x512xi32>
    %c2146121005_i32_2 = arith.constant 2146121005 : i32
    %20 = vector.broadcast %c2146121005_i32_2 : i32 to vector<8x512xi32>
    %21 = arith.muli %19, %20 : vector<8x512xi32>
    %22 = vector.broadcast %8 : i32 to vector<8x512xi32>
    %23 = arith.xori %21, %22 : vector<8x512xi32>
    %c15_i32_3 = arith.constant 15 : i32
    %24 = vector.broadcast %c15_i32_3 : i32 to vector<8x512xi32>
    %25 = arith.shrui %23, %24 : vector<8x512xi32>
    %26 = arith.xori %23, %25 : vector<8x512xi32>
    %c-2073254261_i32_4 = arith.constant -2073254261 : i32
    %27 = vector.broadcast %c-2073254261_i32_4 : i32 to vector<8x512xi32>
    %28 = arith.muli %26, %27 : vector<8x512xi32>
    %c16_i32_5 = arith.constant 16 : i32
    %29 = vector.broadcast %c16_i32_5 : i32 to vector<8x512xi32>
    %30 = arith.shrui %28, %29 : vector<8x512xi32>
    %31 = arith.xori %28, %30 : vector<8x512xi32>
    %c9_i32_6 = arith.constant 9 : i32
    %32 = vector.broadcast %c9_i32_6 : i32 to vector<8x512xi32>
    %33 = arith.shrui %31, %32 : vector<8x512xi32>
    %c1065353216_i32 = arith.constant 1065353216 : i32
    %34 = vector.broadcast %c1065353216_i32 : i32 to vector<8x512xi32>
    %35 = arith.ori %33, %34 : vector<8x512xi32>
    %36 = tpu.bitcast %35 : vector<8x512xi32> -> vector<8x512xf32>
    %cst = arith.constant 1.000000e+00 : f32
    %37 = vector.broadcast %cst : f32 to vector<8x512xf32>
    %38 = arith.subf %36, %37 : vector<8x512xf32>
    %c0_7 = arith.constant 0 : index
    %c0_8 = arith.constant 0 : index
    %39 = vector.load %arg2[%c0_7, %c0_8] : memref<8x512xf32, #tpu.memory_space<vmem>>, vector<8x512xf32>
    tpu.vector_store %arg2[%c0_7, %c0_8], %38 {strides = array<i32>} : memref<8x512xf32, #tpu.memory_space<vmem>>, vector<8x512xf32>,
    return
  }
  func.func @transform_0(%arg0: i32, %arg1: memref<1xi32, #tpu.memory_space<smem>>) -> (i32, i32) {
    %c0_i32 = arith.constant 0 : i32
    %c0_i32_0 = arith.constant 0 : i32
    return %arg0, %c0_i32 : i32, i32
  }
}

</mosaic_0001>

<llo_original>
// kernel: run.1
$region0: #{run.1}
  #allocation0 [shape = 'u32[]', space=smem, size = 0x4, offset = 0x4, fixed_abs, tag = 'smem constant byte address 0x4 - core index']
  #allocation1 [shape = 'u32[144,128]{1,0:T(1,128)}', space=vmem, size = 0x12000, scoped, tag = 'internal scratch']
  #allocation2 [shape = 's32[1]{0}', space=sflag, size = 0x4, scoped, tag = 'scoped memory for run.1']
  #allocation3 [shape = 's32[1]{0:T(128)S(6)}', space=smem, size = 0x200, scoped, tag = 'prefetched SMEM operand 0']
  %s0 = inlined_call_operand.<no memory space> [shape: s32[1], index: 0, kind: input, shape index: {}]
  %s1 = inlined_call_operand.vmem [shape: f32[8,512], index: 1, kind: output, shape index: {}]
  %s2 = sld [smem:[#allocation0]]
  $region10: #{run.1} parent=0
    _
  %s4 = ssub.s32 1, %s2
  %s5 = scalar_select 0, %s4, %s2
  %6 = sst [smem:[#allocation3]] %s0
  %s7 = sld [smem:[#allocation3]]
  %s8 = sshrl.u32 %s7, 16
  %s9 = sxor.u32 %s7, %s8
  %s10 = smul.u32 %s9, 2146121005
  %s11 = sshrl.u32 %s10, 15
  %s12 = sxor.u32 %s10, %s11
  %s13 = smul.u32 %s12, 2221713035
  %s14 = sshrl.u32 %s13, 16
  %s15 = sxor.u32 %s13, %s14
  %s16 = smul.u32 0, 4096
  %v17 = vlaneseq
  %v18 = vshrl.u32 %v17, 7
  %v19 = vlaneseq
  %v20 = vand.u32 %v19, 127
  %v21 = vadd.s32 %v20, 128
  %v22 = vadd.s32 %v20, 256
  %v23 = vadd.s32 %v20, 384
  %v24 = vshll.u32 %v18, 9
  %v25 = vadd.s32 %v24, %v20
  %v26 = vadd.s32 %v24, %v21
  %v27 = vadd.s32 %v24, %v22
  %v28 = vadd.s32 %v24, %v23
  %v29 = vstv %s16
  %v30 = vadd.s32 %v25, %v29
  %v31 = vadd.s32 %v26, %v29
  %v32 = vadd.s32 %v27, %v29
  %v33 = vadd.s32 %v28, %v29
  %v34 = vshrl.u32 %v30, 16
  %v35 = vshrl.u32 %v31, 16
  %v36 = vshrl.u32 %v32, 16
  %v37 = vshrl.u32 %v33, 16
  %v38 = vxor.u32 %v30, %v34
  %v39 = vxor.u32 %v31, %v35
  %v40 = vxor.u32 %v32, %v36
  %v41 = vxor.u32 %v33, %v37
  %v42 = vmul.u32 %v38, 2146121005
  %v43 = vmul.u32 %v39, 2146121005
  %v44 = vmul.u32 %v40, 2146121005
  %v45 = vmul.u32 %v41, 2146121005
  %v46 = vstv %s15
  %v47 = vxor.u32 %v42, %v46
  %v48 = vxor.u32 %v43, %v46
  %v49 = vxor.u32 %v44, %v46
  %v50 = vxor.u32 %v45, %v46
  %v51 = vshrl.u32 %v47, 15
  %v52 = vshrl.u32 %v48, 15
  %v53 = vshrl.u32 %v49, 15
  %v54 = vshrl.u32 %v50, 15
  %v55 = vxor.u32 %v47, %v51
  %v56 = vxor.u32 %v48, %v52
  %v57 = vxor.u32 %v49, %v53
  %v58 = vxor.u32 %v50, %v54
  %v59 = vmul.u32 %v55, 2221713035
  %v60 = vmul.u32 %v56, 2221713035
  %v61 = vmul.u32 %v57, 2221713035
  %v62 = vmul.u32 %v58, 2221713035
  %v63 = vshrl.u32 %v59, 16
  %v64 = vshrl.u32 %v60, 16
  %v65 = vshrl.u32 %v61, 16
  %v66 = vshrl.u32 %v62, 16
  %v67 = vxor.u32 %v59, %v63
  %v68 = vxor.u32 %v60, %v64
  %v69 = vxor.u32 %v61, %v65
  %v70 = vxor.u32 %v62, %v66
  %v71 = vshrl.u32 %v67, 9
  %v72 = vshrl.u32 %v68, 9
  %v73 = vshrl.u32 %v69, 9
  %v74 = vshrl.u32 %v70, 9
  %v75 = vor.u32 %v71, 1065353216
  %v76 = vor.u32 %v72, 1065353216
  %v77 = vor.u32 %v73, 1065353216
  %v78 = vor.u32 %v74, 1065353216
  %v83 = vsub.f32 %v75, 1.0
  %v84 = vsub.f32 %v76, 1.0
  %v85 = vsub.f32 %v77, 1.0
  %v86 = vsub.f32 %v78, 1.0
  %87 = vst [vmem:[%s1] sm:$0xff] %v83
  %88 = vst [vmem:[%s1 + $0x8] sm:$0xff] %v84
  %89 = vst [vmem:[%s1 + $0x10] sm:$0xff] %v85
  %90 = vst [vmem:[%s1 + $0x18] sm:$0xff] %v86
  // Predicated region
  $region2: #{run.1} parent=0 // pred_check
    _
  $region3: #{run.1} parent=0 // pred_check_branch
    %92 = sbr.rel (0) target = $region5
  $region4: #{run.1} parent=0 // pred_region
    _
  $region5: #{run.1} parent=0 // pred_fallthru
    _
  // Predicated region
  $region6: #{run.1} parent=0 // pred_check
    _
  $region7: #{run.1} parent=0 // pred_check_branch
    %94 = sbr.rel (0) target = $region9
  $region8: #{run.1} parent=0 // pred_region
    _
  $region9: #{run.1} parent=0 // pred_fallthru
    _

</llo_original>
